<compile_context>
chip_gen: v5e
topology: v5e:2x2
jax: 0.10.0
libtpu: 0.0.40
codegen_flags: <defaults>
</compile_context>

<pallas_src>
import jax
import jax.numpy as jnp
from jax import lax
from jax.experimental import pallas as pl
from jax.experimental.pallas import tpu as pltpu

_LANES = 128
_TARGET_BLOCK_BYTES = 4 * 1024 * 1024  # ~4 MiB of inputs per grid step


def _round_down(x, m):
    return (x // m) * m


# ---------------------------------------------------------------------------
# C == 2 (binary SOP): lane-dense specialized kernel.
# ---------------------------------------------------------------------------

def _make_c2_kernel(num_panels, tile_panels):
    def kernel(l0_ref, l1_ref, lab_ref, out_ref, acc_ref):
        i = pl.program_id(0)

        @pl.when(i == 0)
        def _init():
            acc_ref[...] = jnp.zeros_like(acc_ref)

        l0 = l0_ref[...].astype(jnp.float32)      # (T, 128) logits of class 0
        l1 = l1_ref[...].astype(jnp.float32)      # (T, 128) logits of class 1
        lab = lab_ref[...].astype(jnp.float32)    # (T, 128) labels in {0, 1}

        # Binary CE: loss = softplus(logit_other - logit_target)
        #   margin = (l1 - l0) * (+1 if label==0 else -1) = (l1 - l0)*(1 - 2*lab)
        margin = (l1 - l0) * (1.0 - 2.0 * lab)
        per_ex = jnp.maximum(margin, 0.0) + jnp.log(1.0 + jnp.exp(-jnp.abs(margin)))

        # Ragged last block: panel rows >= num_panels hold unspecified data.
        prow = lax.broadcasted_iota(jnp.int32, (tile_panels, _LANES), 0)
        valid = (i * tile_panels + prow) < num_panels
        per_ex = jnp.where(valid, per_ex, 0.0)

        # Per-lane partial sums (VMEM); no per-step cross-lane reduce.
        acc_ref[...] += jnp.sum(per_ex, axis=0, keepdims=True)

        @pl.when(i == pl.num_programs(0) - 1)
        def _finalize():
            out_ref[0] = jnp.sum(acc_ref[...])

    return kernel


def _sop_loss_sum_c2_pallas(y_pred, y_true, tile_panels=None):
    """Sum of per-example CE losses; requires y_pred (N, 2) with N % 128 == 0."""
    n, c = y_pred.shape
    assert c == 2 and n > 0 and n % _LANES == 0
    num_panels = n // _LANES
    itemsize = jnp.dtype(y_pred.dtype).itemsize

    # Lane-dense, 1 example / lane.  Logits keep their native dtype (bf16 ok);
    # the f32 cast happens in-VMEM inside the kernel.
    l0 = y_pred[:, 0].reshape(num_panels, _LANES)
    l1 = y_pred[:, 1].reshape(num_panels, _LANES)
    lab = y_true.astype(jnp.int8).reshape(num_panels, _LANES)  # 1 B / example

    if tile_panels is None:
        bytes_per_panel = _LANES * (2 * itemsize + 1)
        tile_panels = max(32, _TARGET_BLOCK_BYTES // bytes_per_panel)
    tile_panels = int(tile_panels)
    if tile_panels >= num_panels:
        tile_panels = num_panels                      # single full-extent block
    else:
        tile_panels = max(32, _round_down(tile_panels, 32))
        tile_panels = min(tile_panels, num_panels)

    num_tiles = pl.cdiv(num_panels, tile_panels)
    block_bytes = tile_panels * _LANES * (2 * itemsize + 1)
    vmem_limit = int(min(48 << 20, max(32 << 20, 4 * block_bytes + (2 << 20))))

    kernel = _make_c2_kernel(num_panels, tile_panels)
    out = pl.pallas_call(
        kernel,
        out_shape=jax.ShapeDtypeStruct((1,), jnp.float32),
        grid=(num_tiles,),
        in_specs=[
            pl.BlockSpec((tile_panels, _LANES), lambda i: (i, 0)),
            pl.BlockSpec((tile_panels, _LANES), lambda i: (i, 0)),
            pl.BlockSpec((tile_panels, _LANES), lambda i: (i, 0)),
        ],
        out_specs=pl.BlockSpec(memory_space=pltpu.MemorySpace.SMEM),
        scratch_shapes=[pltpu.VMEM((1, _LANES), jnp.float32)],
        compiler_params=pltpu.CompilerParams(
            dimension_semantics=("arbitrary",),
            vmem_limit_bytes=vmem_limit,
        ),
    )(l0, l1, lab)
    return out[0]


# ---------------------------------------------------------------------------
# General C (kept for completeness; SOP itself is C == 2).
# ---------------------------------------------------------------------------

def _make_general_kernel(n_valid, tile_rows, num_classes):
    def kernel(logits_ref, labels_ref, out_ref, acc_ref):
        i = pl.program_id(0)

        @pl.when(i == 0)
        def _init():
            acc_ref[0] = 0.0

        logits = logits_ref[...].astype(jnp.float32)   # (T, C)
        labels = labels_ref[...]                       # (T, 1) int32

        row = lax.broadcasted_iota(jnp.int32, (tile_rows, 1), 0)
        valid = (i * tile_rows + row) < n_valid

        rmax = jnp.max(logits, axis=-1, keepdims=True)
        lse = rmax + jnp.log(jnp.sum(jnp.exp(logits - rmax), axis=-1, keepdims=True))
        col = lax.broadcasted_iota(jnp.int32, (tile_rows, num_classes), 1)
        picked = jnp.sum(jnp.where(col == labels, logits, 0.0),
                         axis=-1, keepdims=True)
        per_ex = jnp.where(valid, lse - picked, 0.0)
        acc_ref[0] += jnp.sum(per_ex)

        @pl.when(i == pl.num_programs(0) - 1)
        def _finalize():
            out_ref[0] = acc_ref[0]

    return kernel


def _sop_loss_sum_general_pallas(y_pred, y_true, tile_rows=None):
    n, c = y_pred.shape
    labels = y_true.astype(jnp.int32).reshape(n, 1)
    itemsize = jnp.dtype(y_pred.dtype).itemsize

    if tile_rows is None:
        tile_rows = max(32, _TARGET_BLOCK_BYTES // max(1, c * itemsize))
    tile_rows = int(tile_rows)
    if tile_rows >= n:
        tile_rows = n                                  # single full-extent block
    else:
        tile_rows = max(32, _round_down(tile_rows, 32))
        tile_rows = min(tile_rows, n)

    num_tiles = pl.cdiv(n, tile_rows)
    block_bytes = tile_rows * (c * itemsize + 4)
    vmem_limit = int(min(48 << 20, max(32 << 20, 4 * block_bytes + (2 << 20))))

    kernel = _make_general_kernel(n, tile_rows, c)
    out = pl.pallas_call(
        kernel,
        out_shape=jax.ShapeDtypeStruct((1,), jnp.float32),
        grid=(num_tiles,),
        in_specs=[
            pl.BlockSpec((tile_rows, c), lambda i: (i, 0)),
            pl.BlockSpec((tile_rows, 1), lambda i: (i, 0)),
        ],
        out_specs=pl.BlockSpec(memory_space=pltpu.MemorySpace.SMEM),
        scratch_shapes=[pltpu.SMEM((1,), jnp.float32)],
        compiler_params=pltpu.CompilerParams(
            dimension_semantics=("arbitrary",),
            vmem_limit_bytes=vmem_limit,
        ),
    )(y_pred, labels)
    return out[0]


# ---------------------------------------------------------------------------
# Public API + reference
# ---------------------------------------------------------------------------

def _ce_sum_f32(logits, labels):
    """Pure-JAX sum of per-example CE (used for the <128-row tail + testing)."""
    logits = logits.astype(jnp.float32)
    lse = jax.nn.logsumexp(logits, axis=-1)
    picked = jnp.take_along_axis(
        logits, labels.astype(jnp.int32)[:, None], axis=-1)[:, 0]
    return jnp.sum(lse - picked)


def sop_loss_ref(y_pred, y_true):
    """Reference == torch nn.CrossEntropyLoss (mean reduction)."""
    return _ce_sum_f32(y_pred, y_true) / y_pred.shape[0]


def sop_loss(y_pred, y_true, *, tile_panels=None, tile_rows=None):
    """SOPLoss.forward: cross-entropy with integer targets, mean reduction."""
    n, c = y_pred.shape
    if c == 2:
        n_main = _round_down(n, _LANES)
        total = jnp.float32(0.0)
        if n_main > 0:
            y_main = y_pred if n_main == n else y_pred[:n_main]
            t_main = y_true if n_main == n else y_true[:n_main]
            total = total + _sop_loss_sum_c2_pallas(
                y_main, t_main, tile_panels=tile_panels)
        if n_main < n:
            # <128 leftover rows: a kernel launch here is pure overhead.
            total = total + _ce_sum_f32(y_pred[n_main:], y_true[n_main:])
        return total / n
    return _sop_loss_sum_general_pallas(y_pred, y_true, tile_rows=tile_rows) / n


if __name__ == "__main__":
    key = jax.random.PRNGKey(0)
    k1, k2, k3, k4, k5, k6 = jax.random.split(key, 6)

    # 1) Binary SOP, f32, N multiple of 128 -> single lane-dense block.
    n1 = 512
    logits1 = jax.random.normal(k1, (n1, 2), dtype=jnp.float32)
    labels1 = jax.random.randint(k2, (n1,), 0, 2, dtype=jnp.int32)
    out1 = sop_loss(logits1, labels1)
    jax.block_until_ready(out1)
    ref1 = sop_loss_ref(logits1, labels1)
    assert jnp.allclose(out1, ref1, atol=1e-5, rtol=1e-5), (out1, ref1)

    # 2) Binary SOP, bf16 logits + int8 labels, multi-step grid with a ragged
    #    last block (40 panels, tile_panels=32 -> grid of 2).
    n2 = 5120
    logits2 = jax.random.normal(k3, (n2, 2), dtype=jnp.float32).astype(jnp.bfloat16)
    labels2 = jax.random.randint(k4, (n2,), 0, 2, dtype=jnp.int32)
    out2 = sop_loss(logits2, labels2, tile_panels=32)
    jax.block_until_ready(out2)
    ref2 = sop_loss_ref(logits2, labels2)
    assert jnp.allclose(out2, ref2, atol=1e-5, rtol=1e-5), (out2, ref2)

    # 3) Ragged batch (N not a multiple of 128): bulk via the kernel, the
    #    <128-row tail in plain JAX, mean over the true N.
    out3 = sop_loss(logits1[:500], labels1[:500])
    jax.block_until_ready(out3)
    ref3 = sop_loss_ref(logits1[:500], labels1[:500])
    assert jnp.allclose(out3, ref3, atol=1e-5, rtol=1e-5), (out3, ref3)

    # 4) General multi-class path (C != 2), multi-step grid + partial block.
    n4, c4 = 200, 8
    logits4 = jax.random.normal(k5, (n4, c4), dtype=jnp.float32)
    labels4 = jax.random.randint(k6, (n4,), 0, c4, dtype=jnp.int32)
    out4 = sop_loss(logits4, labels4, tile_rows=64)
    jax.block_until_ready(out4)
    ref4 = sop_loss_ref(logits4, labels4)
    assert jnp.allclose(out4, ref4, atol=1e-5, rtol=1e-5), (out4, ref4)

    print("KERNEL_OK")
</pallas_src>

<mosaic_0001>
module attributes {stable_mosaic.version = 11 : i64} {
  func.func @kernel(%arg0: i32, %arg1: memref<4x128xf32, #tpu.memory_space<vmem>>, %arg2: memref<4x128xf32, #tpu.memory_space<vmem>>, %arg3: memref<4x128xi8, #tpu.memory_space<vmem>>, %arg4: memref<1xf32, #tpu.memory_space<smem>>, %arg5: memref<1x128xf32, #tpu.memory_space<vmem>>) attributes {dimension_semantics = [#tpu.dimension_semantics<arbitrary>], iteration_bounds = array<i64: 1>, scalar_prefetch = 0 : i64, scratch_operands = 1 : i64, tpu.core_type = #tpu.core_type<tc>, window_params = [{transform_indices = @transform_0, window_bounds = array<i64: 4, 128>}, {transform_indices = @transform_1, window_bounds = array<i64: 4, 128>}, {transform_indices = @transform_2, window_bounds = array<i64: 4, 128>}, {transform_indices = @transform_3, window_bounds = array<i64: 1>}]} {
    %c0_i32 = arith.constant 0 : i32
    %0 = arith.cmpi eq, %arg0, %c0_i32 : i32
    %1 = arith.extui %0 : i1 to i32
    %c0_i32_0 = arith.constant 0 : i32
    %2 = arith.cmpi ne, %1, %c0_i32_0 : i32
    scf.if %2 {
      %cst_19 = arith.constant 0.000000e+00 : f32
      %39 = vector.broadcast %cst_19 : f32 to vector<1x128xf32>
      %c0_20 = arith.constant 0 : index
      %c0_21 = arith.constant 0 : index
      %40 = vector.load %arg5[%c0_20, %c0_21] : memref<1x128xf32, #tpu.memory_space<vmem>>, vector<1x128xf32>
      tpu.vector_store %arg5[%c0_20, %c0_21], %39 {strides = array<i32>} : memref<1x128xf32, #tpu.memory_space<vmem>>, vector<1x128xf32>,
    } else {
    }
    %c0 = arith.constant 0 : index
    %c0_1 = arith.constant 0 : index
    %3 = vector.load %arg1[%c0, %c0_1] : memref<4x128xf32, #tpu.memory_space<vmem>>, vector<4x128xf32>
    %c0_2 = arith.constant 0 : index
    %c0_3 = arith.constant 0 : index
    %4 = vector.load %arg2[%c0_2, %c0_3] : memref<4x128xf32, #tpu.memory_space<vmem>>, vector<4x128xf32>
    %c0_4 = arith.constant 0 : index
    %c0_5 = arith.constant 0 : index
    %5 = vector.load %arg3[%c0_4, %c0_5] : memref<4x128xi8, #tpu.memory_space<vmem>>, vector<4x128xi8>
    %6 = arith.sitofp %5 : vector<4x128xi8> to vector<4x128xf32>
    %7 = arith.subf %4, %3 : vector<4x128xf32>
    %cst = arith.constant 2.000000e+00 : f32
    %8 = vector.broadcast %cst : f32 to vector<4x128xf32>
    %9 = arith.mulf %8, %6 : vector<4x128xf32>
    %cst_6 = arith.constant 1.000000e+00 : f32
    %10 = vector.broadcast %cst_6 : f32 to vector<4x128xf32>
    %11 = arith.subf %10, %9 : vector<4x128xf32>
    %12 = arith.mulf %7, %11 : vector<4x128xf32>
    %cst_7 = arith.constant 0.000000e+00 : f32
    %13 = vector.broadcast %cst_7 : f32 to vector<4x128xf32>
    %14 = arith.maximumf %12, %13 : vector<4x128xf32>
    %15 = math.absf %12 : vector<4x128xf32>
    %cst_8 = arith.constant 0.000000e+00 : f32
    %16 = vector.broadcast %cst_8 : f32 to vector<4x128xf32>
    %17 = arith.subf %16, %15 : vector<4x128xf32>
    %18 = math.exp %17 : vector<4x128xf32>
    %cst_9 = arith.constant 1.000000e+00 : f32
    %19 = vector.broadcast %cst_9 : f32 to vector<4x128xf32>
    %20 = arith.addf %19, %18 : vector<4x128xf32>
    %21 = math.log %20 : vector<4x128xf32>
    %22 = arith.addf %14, %21 : vector<4x128xf32>
    %23 = tpu.iota {dimensions = array<i32: 0>} : vector<4x128xi32>
    %c4_i32 = arith.constant 4 : i32
    %24 = arith.muli %arg0, %c4_i32 : i32
    %25 = vector.broadcast %24 : i32 to vector<4x128xi32>
    %26 = arith.addi %25, %23 : vector<4x128xi32>
    %c4_i32_10 = arith.constant 4 : i32
    %27 = vector.broadcast %c4_i32_10 : i32 to vector<4x128xi32>
    %28 = arith.cmpi slt, %26, %27 : vector<4x128xi32>
    %cst_11 = arith.constant 0.000000e+00 : f32
    %29 = vector.broadcast %cst_11 : f32 to vector<4x128xf32>
    %30 = arith.select %28, %22, %29 : vector<4x128xi1>, vector<4x128xf32>
    %c0_12 = arith.constant 0 : index
    %c0_13 = arith.constant 0 : index
    %31 = vector.load %arg5[%c0_12, %c0_13] : memref<1x128xf32, #tpu.memory_space<vmem>>, vector<1x128xf32>
    %cst_14 = arith.constant dense<0.000000e+00> : vector<128xf32>
    %32 = vector.multi_reduction <add>, %30, %cst_14 [0] : vector<4x128xf32> to vector<128xf32>
    %33 = vector.shape_cast %32 : vector<128xf32> to vector<1x128xf32>
    %34 = arith.addf %31, %33 : vector<1x128xf32>
    %c0_15 = arith.constant 0 : index
    %c0_16 = arith.constant 0 : index
    %35 = vector.load %arg5[%c0_15, %c0_16] : memref<1x128xf32, #tpu.memory_space<vmem>>, vector<1x128xf32>
    tpu.vector_store %arg5[%c0_15, %c0_16], %34 {strides = array<i32>} : memref<1x128xf32, #tpu.memory_space<vmem>>, vector<1x128xf32>,
    %c0_i32_17 = arith.constant 0 : i32
    %36 = arith.cmpi eq, %arg0, %c0_i32_17 : i32
    %37 = arith.extui %36 : i1 to i32
    %c0_i32_18 = arith.constant 0 : i32
    %38 = arith.cmpi ne, %37, %c0_i32_18 : i32
    scf.if %38 {
      %c0_19 = arith.constant 0 : index
      %c0_20 = arith.constant 0 : index
      %39 = vector.load %arg5[%c0_19, %c0_20] : memref<1x128xf32, #tpu.memory_space<vmem>>, vector<1x128xf32>
      %40 = vector.shape_cast %39 : vector<1x128xf32> to vector<1x1x128xf32>
      %cst_21 = arith.constant dense<0.000000e+00> : vector<1xf32>
      %41 = vector.multi_reduction <add>, %40, %cst_21 [1, 2] : vector<1x1x128xf32> to vector<1xf32>
      %42 = vector.shape_cast %41 : vector<1xf32> to vector<1x1x1xf32>
      %43 = vector.extract %42[0, 0, 0] : f32 from vector<1x1x1xf32>
      %c0_22 = arith.constant 0 : index
      %44 = memref.load %arg4[%c0_22] : memref<1xf32, #tpu.memory_space<smem>>
      memref.store %43, %arg4[%c0_22] : memref<1xf32, #tpu.memory_space<smem>>
    } else {
    }
    return
  }
  func.func @transform_0(%arg0: i32) -> (i32, i32) {
    %c0_i32 = arith.constant 0 : i32
    %c0_i32_0 = arith.constant 0 : i32
    return %arg0, %c0_i32 : i32, i32
  }
  func.func @transform_1(%arg0: i32) -> (i32, i32) {
    %c0_i32 = arith.constant 0 : i32
    %c0_i32_0 = arith.constant 0 : i32
    return %arg0, %c0_i32 : i32, i32
  }
  func.func @transform_2(%arg0: i32) -> (i32, i32) {
    %c0_i32 = arith.constant 0 : i32
    %c0_i32_0 = arith.constant 0 : i32
    return %arg0, %c0_i32 : i32, i32
  }
  func.func @transform_3(%arg0: i32) -> i32 {
    %c0_i32 = arith.constant 0 : i32
    %c0_i32_0 = arith.constant 0 : i32
    return %c0_i32 : i32
  }
}

</mosaic_0001>

<llo_original>
// kernel: tpu_custom_call.1
$region0: #{tpu_custom_call.1}
  #allocation0 [shape = 'u32[]', space=smem, size = 0x4, offset = 0x4, fixed_abs, tag = 'smem constant byte address 0x4 - core index']
  #allocation1 [shape = 'u32[72,128]{1,0:T(1,128)}', space=vmem, size = 0x9000, scoped, tag = 'internal scratch']
  #allocation2 [shape = 'f32[1,128]{1,0:T(1,128)}', space=vmem, size = 0x200, scoped, tag = 'scratch operand']
  %s0 = inlined_call_operand.hbm [shape: f32[4,128], index: 0, kind: input, shape index: {}]
  %s1 = inlined_call_operand.hbm [shape: f32[4,128], index: 1, kind: input, shape index: {}]
  %s2 = inlined_call_operand.vmem [shape: s8[4,128], index: 2, kind: input, shape index: {}]
  %s3 = inlined_call_operand.hbm [shape: f32[1], index: 3, kind: output, shape index: {}]
  %s4 = sld [smem:[#allocation0]]
  $region38: #{tpu_custom_call.1} parent=0
    _
  %s6 = ssub.s32 1, %s4
  %s7 = scalar_select 0, %s6, %s4
  $region1: #{tpu_custom_call.1} parent=0
    #allocation3 [shape = 'u8[2048]{0}', space=vmem, size = 0x800, scoped, tag = 'input window, operand 0, single buffered']
    #allocation4 [shape = 's32[1]{0}', space=sflag, size = 0x4, scoped, tag = 'scoped memory for tpu_custom_call.1']
    #allocation5 [shape = 's32[1]{0}', space=sflag, size = 0x4, scoped, tag = 'scoped memory for tpu_custom_call.1']
    #allocation6 [shape = 'u8[2048]{0}', space=vmem, size = 0x800, scoped, tag = 'input window, operand 1, single buffered']
    #allocation7 [shape = 's32[1]{0}', space=sflag, size = 0x4, scoped, tag = 'scoped memory for tpu_custom_call.1']
    #allocation8 [shape = 'u8[512]{0}', space=smem, size = 0x200, scoped, tag = 'output window, operand 0, single buffered']
    %8 = vsyncpa [#allocation4], 0
    %9 = vsyncpa [#allocation7], 0
    %10 = vsyncpa [#allocation5], 0
    // Predicated region
    $region2: #{tpu_custom_call.1} parent=1 // pred_check
      _
    $region3: #{tpu_custom_call.1} parent=1 // pred_check_branch
      %12 = sbr.rel (0) target = $region5
    $region4: #{tpu_custom_call.1} parent=1 // pred_region
      %14 = vsyncadd [#allocation4], 0
      %s16 = sshll.u32 %s0, 4
      %s17 = int_to_ptr.hbm [resolvable:$true] %s16
      %s18 = sshll.u32 [#allocation3], 4
      %s19 = int_to_ptr.vmem [resolvable:$true] %s18
      %21 = dma.hbm_to_vmem [thread:$0]  %s17, 64, %s19, [#allocation4]
    $region5: #{tpu_custom_call.1} parent=1 // pred_fallthru
      _
    // Predicated region
    $region6: #{tpu_custom_call.1} parent=1 // pred_check
      _
    $region7: #{tpu_custom_call.1} parent=1 // pred_check_branch
      %23 = sbr.rel (0) target = $region9
    $region8: #{tpu_custom_call.1} parent=1 // pred_region
      %25 = vsyncadd [#allocation7], 0
      %s27 = sshll.u32 %s1, 4
      %s28 = int_to_ptr.hbm [resolvable:$true] %s27
      %s29 = sshll.u32 [#allocation6], 4
      %s30 = int_to_ptr.vmem [resolvable:$true] %s29
      %32 = dma.hbm_to_vmem [thread:$0]  %s28, 64, %s30, [#allocation7]
    $region9: #{tpu_custom_call.1} parent=1 // pred_fallthru
      _
    // Predicated region
    $region10: #{tpu_custom_call.1} parent=1 // pred_check
      _
    $region11: #{tpu_custom_call.1} parent=1 // pred_check_branch
      %34 = sbr.rel (0) target = $region13
    $region12: #{tpu_custom_call.1} parent=1 // pred_region
      _
    $region13: #{tpu_custom_call.1} parent=1 // pred_fallthru
      _
    // Predicated region
    $region14: #{tpu_custom_call.1} parent=1 // pred_check
      _
    $region15: #{tpu_custom_call.1} parent=1 // pred_check_branch
      %36 = sbr.rel (0) target = $region17
    $region16: #{tpu_custom_call.1} parent=1 // pred_region
      %38 = dma.done [#allocation4], 64
    $region17: #{tpu_custom_call.1} parent=1 // pred_fallthru
      _
    // Predicated region
    $region18: #{tpu_custom_call.1} parent=1 // pred_check
      _
    $region19: #{tpu_custom_call.1} parent=1 // pred_check_branch
      %40 = sbr.rel (0) target = $region21
    $region20: #{tpu_custom_call.1} parent=1 // pred_region
      %42 = dma.done [#allocation7], 64
    $region21: #{tpu_custom_call.1} parent=1 // pred_fallthru
      _
    %p43 = scmp.eq.s32.totalorder 0, 0
    // Predicated region
    $region22: #{tpu_custom_call.1} parent=1 // pred_check
      %p44 = pneg %p43
    $region23: #{tpu_custom_call.1} parent=1 // pred_check_branch
      %46 = sbr.rel (%p44) target = $region25
    $region24: #{tpu_custom_call.1} parent=1 // pred_region
      %47 = vst [vmem:[#allocation2] sm:$0x1] 0.0
    $region25: #{tpu_custom_call.1} parent=1 // pred_fallthru
      _
    %v48 = vld [vmem:[#allocation3] sm:$0xf]
    %v49 = vld [vmem:[#allocation6] sm:$0xf]
    %v50 = vld [vmem:[%s2] sm:$0x1]
    %v51 = vunpack.c.0.s8 %v50
    %v52 = vcvt.s32.f32 %v51
    %v53 = vsub.f32 %v49, %v48
    %v54 = vmul.f32 %v52, 2.0
    %v55 = vsub.f32 1.0, %v54
    %v56 = vmul.f32 %v53, %v55
    %v57 = vmax.f32 %v56, 0.0
    %v58 = vand.u32 2147483647, %v56
    %v59 = vsub.f32 0.0, %v58
    %v60 = vmul.f32 %v59, 1.442695
    %v61 = vpow.pop %v60
    %v62 = vadd.f32 %v61, 1.0
    %v63 = vlog2.pop %v62
    %v64 = vmul.f32 %v63, 0.6931472
    %v65 = vadd.f32 %v57, %v64
    %v66 = vlaneseq
    %v67 = vshrl.u32 %v66, 7
    %s68 = smul.u32 0, 4
    %v69 = vstv %s68
    %v70 = vadd.s32 %v69, %v67
    %vm71 = vcmp.lt.s32.totalorder %v70, 4
    %v72 = vsel %vm71, %v65, 0.0
    %v73 = vld [vmem:[#allocation2] sm:$0x1]
    %vm74 = vcmask 1043456
    %v75 = vsel %vm74, %v72, 0.0
    %v76 = vrot.slane %v75, 4
    %v77 = vadd.f32 %v75, %v76
    %v78 = vrot.slane %v77, 2
    %v79 = vadd.f32 %v77, %v78
    %v80 = vrot.slane %v79, 1
    %v81 = vadd.f32 %v79, %v80
    %v82 = vadd.f32 %v73, %v81
    %83 = vst [vmem:[#allocation2] sm:$0x1] %v82
    // Predicated region
    $region26: #{tpu_custom_call.1} parent=1 // pred_check
      %p84 = pneg %p43
    $region27: #{tpu_custom_call.1} parent=1 // pred_check_branch
      %86 = sbr.rel (%p84) target = $region29
    $region28: #{tpu_custom_call.1} parent=1 // pred_region
      %v87 = vld [vmem:[#allocation2] sm:$0x1]
      %vm88 = vcmask 1040384
      %v89 = vsel %vm88, %v87, 0.0
      %90 = vadd.xlane.f32.xlu0 %v89
      %v91 = vpop.xlane.xlu0 %90
      %v92 = vrot.slane %v91, 4
      %v93 = vadd.f32 %v91, %v92
      %v94 = vrot.slane %v93, 2
      %v95 = vadd.f32 %v93, %v94
      %v96 = vrot.slane %v95, 1
      %v97 = vadd.f32 %v95, %v96
      %s98 = vtos %v97
      %s99 = scalar_lea.smem [#allocation8], 0
      %100 = sst [smem:[%s99]] %s98
    $region29: #{tpu_custom_call.1} parent=1 // pred_fallthru
      _
    // Predicated region
    $region30: #{tpu_custom_call.1} parent=1 // pred_check
      _
    $region31: #{tpu_custom_call.1} parent=1 // pred_check_branch
      %102 = sbr.rel (0) target = $region33
    $region32: #{tpu_custom_call.1} parent=1 // pred_region
      %104 = vsyncadd [#allocation5], 0
      %s106 = sshll.u32 %s3, 4
      %s107 = int_to_ptr.hbm [resolvable:$true] %s106
      %109 = dma.smem_to_hbm [#allocation8], 16, %s107, [#allocation5]
    $region33: #{tpu_custom_call.1} parent=1 // pred_fallthru
      _
    // Predicated region
    $region34: #{tpu_custom_call.1} parent=1 // pred_check
      _
    $region35: #{tpu_custom_call.1} parent=1 // pred_check_branch
      %111 = sbr.rel (0) target = $region37
    $region36: #{tpu_custom_call.1} parent=1 // pred_region
      %113 = dma.done [#allocation5], 16
    $region37: #{tpu_custom_call.1} parent=1 // pred_fallthru
      _
    %114 = sfence
    %115 = vsyncpa [#allocation4], 1
    %116 = vsyncpa [#allocation7], 1
    %117 = vsyncpa [#allocation5], 1

</llo_original>
